<compile_context>
chip_gen: v6e
topology: v6e:2x2x1
jax: 0.10.0
libtpu: 0.0.40
codegen_flags: <defaults>
</compile_context>

<pallas_src>
import functools

import jax
import jax.numpy as jnp
from jax.experimental import pallas as pl
from jax.experimental.pallas import tpu as pltpu


def _round_up(x: int, m: int) -> int:
    return ((x + m - 1) // m) * m


def _choose_tiling(n: int, max_block: int, d: int) -> tuple[int, int]:
    """Returns (tile, padded_n). Tiles are 128/256/512 and always divide padded_n."""
    base = _round_up(max(n, 8), 128)
    cap = max_block
    if d > 2048:
        # Keep double-buffered (T, D)/(D, T) operand tiles inside the v7x 64 MiB VMEM.
        cap = min(cap, 256)
    if base <= 128 or cap < 256:
        return 128, base
    n256 = _round_up(base, 256)
    n512 = _round_up(base, 512)
    # Prefer 512-wide tiles only when the extra padding is modest (<~30%) and there
    # are still >= 2 row blocks (so both v7x TensorCores get work on the "parallel"
    # i axis); otherwise pad to a multiple of 256 and use 256-wide tiles.
    if cap >= 512 and n512 >= 1024 and n512 <= int(1.3 * base):
        return 512, n512
    return 256, n256


def _contrastive_loss_kernel(emb_i_ref, emb_jt_ref, sq_i_ref, sq_j_ref,
                             lbl_i_ref, lbl_j_ref, val_i_ref, val_j_ref,
                             out_ref, acc_ref, *,
                             margin: float, tm: int, tn: int, apply_valid: bool):
    i = pl.program_id(0)
    j = pl.program_id(1)

    # Per-row-block partial sums live in a (8, TN) VMEM accumulator; zero it at the
    # start of every j (reduction) sweep.
    @pl.when(j == 0)
    def _init():
        acc_ref[...] = jnp.zeros_like(acc_ref)

    # MXU matmul. The j operand is pre-transposed to (D, TN) and pre-scaled by -2 in
    # the wrapper, so this is a plain NN matmul (no in-kernel transpose) and the
    # epilogue saves one multiply per pair element.
    dot = jnp.dot(emb_i_ref[...], emb_jt_ref[...],
                  preferred_element_type=jnp.float32)            # (TM, TN) = -2<e_i,e_j>

    dist = jnp.maximum(sq_i_ref[...] + dot + sq_j_ref[...], 0.0)  # (TM, TN)
    same = lbl_i_ref[...] == lbl_j_ref[...]                       # (TM, TN) bool

    # same-label pairs -> dist ; different-label pairs -> relu(margin - dist).
    contrib = jnp.where(same, dist, jnp.maximum(margin - dist, 0.0))

    if apply_valid:
        # Precomputed 0/1 validity vectors zero out padded rows / cols.
        contrib = contrib * (val_i_ref[...] * val_j_ref[...])

    def _accumulate(x):
        # (TM, TN) -> (TM//8, 8, TN) is a vreg-aligned relabeling; the axis-0 sum is
        # pure VPU vreg adds into the (8, TN) accumulator (no per-step XLU reduce and
        # no per-step vector->SMEM scalar transfer).
        acc_ref[...] += x.reshape(tm // 8, 8, tn).sum(axis=0)

    # Only diagonal tiles pay for the diagonal (iota + compare + select) mask.
    @pl.when(i != j)
    def _off_diag():
        _accumulate(contrib)

    @pl.when(i == j)
    def _diag():
        rows = jax.lax.broadcasted_iota(jnp.int32, (tm, tn), 0)
        cols = jax.lax.broadcasted_iota(jnp.int32, (tm, tn), 1)
        _accumulate(jnp.where(rows != cols, contrib, 0.0))

    # Single cross-lane reduce + scalar SMEM write per row block.
    @pl.when(j == pl.num_programs(1) - 1)
    def _finalize():
        out_ref[0, 0] = jnp.sum(acc_ref[...])


def contrastive_loss(embeddings: jax.Array,
                     labels: jax.Array,
                     margin: float = 1.0,
                     *,
                     max_block: int = 512,
                     use_bf16_matmul: bool = False) -> jax.Array:
    """embeddings: (N, D); labels: (N,) -> scalar f32 loss (loss_all=True semantics).

    Requires N > 1 (the reference divides by N-1). Integer labels are compared as
    int32 (exact); float labels are compared as f32 like the PyTorch reference.
    Set use_bf16_matmul=True on v5e/v6e with large D to halve the column-stream HBM
    traffic (slightly changes hinge results for pairs with dist near the margin).
    """
    n, d = embeddings.shape
    if n < 2:
        raise ValueError("ContrastiveLoss requires at least 2 embeddings (divides by N-1).")

    emb = embeddings.astype(jnp.float32)
    if jnp.issubdtype(labels.dtype, jnp.integer):
        lbl = labels.astype(jnp.int32)          # exact label comparison
    else:
        lbl = labels.astype(jnp.float32)

    t, n_pad = _choose_tiling(n, max_block, d)
    pad = n_pad - n
    if pad:
        emb = jnp.pad(emb, ((0, pad), (0, 0)))
        lbl = jnp.pad(lbl, (0, pad))            # value irrelevant: masked by validity

    # Squared norms from the embeddings (O(N*D), one-time XLA work).
    sq = jnp.sum(emb * emb, axis=1)
    sq_col = sq.reshape(n_pad, 1)
    sq_row = sq.reshape(1, n_pad)
    lbl_col = lbl.reshape(n_pad, 1)
    lbl_row = lbl.reshape(1, n_pad)

    # 0/1 validity vectors (rows/cols < n) -- replaces per-element padding checks.
    valid = (jnp.arange(n_pad) < n).astype(jnp.float32)
    val_col = valid.reshape(n_pad, 1)
    val_row = valid.reshape(1, n_pad)

    mm_dtype = jnp.bfloat16 if use_bf16_matmul else jnp.float32
    emb_i = emb.astype(mm_dtype)                                 # (n_pad, D)
    emb_jt = (-2.0 * emb).astype(mm_dtype).T                     # (D, n_pad), pre-scaled
    # TODO(synk): for very large D (> ~8k) add a k grid axis (tile D) to bound VMEM.

    num_i = n_pad // t
    num_j = n_pad // t

    kernel = functools.partial(
        _contrastive_loss_kernel,
        margin=float(margin), tm=t, tn=t, apply_valid=bool(pad))

    bpe = 2 if use_bf16_matmul else 4
    cost = pl.CostEstimate(
        flops=2 * n_pad * n_pad * d + 8 * n_pad * n_pad,
        bytes_accessed=(n_pad * d * bpe                          # i-stream (held across j)
                        + num_i * n_pad * d * bpe                # j-stream (refetched per i)
                        + num_i * num_j * 6 * t * 4              # sq/lbl/valid rows+cols
                        + num_i * 4),
        transcendentals=0)

    # Explicit VMEM budget: double-buffered operand tiles + (t,t) f32 temporaries,
    # clamped to the v7x 64 MiB physical VMEM.
    vmem_est = (2 * 2 * t * d * bpe + 6 * t * t * 4 + 12 * t * 4 * 2 + (2 << 20))
    vmem_limit = int(min(max(vmem_est, 32 * 1024 * 1024), 64 * 1024 * 1024))

    partials = pl.pallas_call(
        kernel,
        out_shape=jax.ShapeDtypeStruct((num_i, 1), jnp.float32),
        grid=(num_i, num_j),
        in_specs=[
            pl.BlockSpec((t, d), lambda i, j: (i, 0)),   # row-block embeddings
            pl.BlockSpec((d, t), lambda i, j: (0, j)),   # col-block embeddings (pre-T, *-2)
            pl.BlockSpec((t, 1), lambda i, j: (i, 0)),   # sq norms (column)
            pl.BlockSpec((1, t), lambda i, j: (0, j)),   # sq norms (row)
            pl.BlockSpec((t, 1), lambda i, j: (i, 0)),   # labels (column)
            pl.BlockSpec((1, t), lambda i, j: (0, j)),   # labels (row)
            pl.BlockSpec((t, 1), lambda i, j: (i, 0)),   # validity (column)
            pl.BlockSpec((1, t), lambda i, j: (0, j)),   # validity (row)
        ],
        out_specs=pl.BlockSpec((1, 1), lambda i, j: (i, 0), memory_space=pltpu.SMEM),
        scratch_shapes=[pltpu.VMEM((8, t), jnp.float32)],
        compiler_params=pltpu.CompilerParams(
            dimension_semantics=("parallel", "arbitrary"),
            vmem_limit_bytes=vmem_limit),
        cost_estimate=cost,
    )(emb_i, emb_jt, sq_col, sq_row, lbl_col, lbl_row, val_col, val_row)

    total = jnp.sum(partials)
    return total / n / (n - 1)


def _reference_loss(embeddings, labels, margin=1.0):
    # Pure-JAX reference matching the PyTorch module semantics.
    emb = embeddings.astype(jnp.float32)
    n = emb.shape[0]
    dot = emb @ emb.T
    sq = jnp.diag(dot)
    dist = jnp.maximum(sq[:, None] - 2.0 * dot + sq[None, :], 0.0)
    eye = jnp.eye(n, dtype=jnp.float32)
    not_eye = 1.0 - eye
    lbl = labels.astype(jnp.float32)
    leq_raw = (lbl[None, :] == lbl[:, None]).astype(jnp.float32)
    leq = not_eye * leq_raw
    lneq = not_eye * (1.0 - leq_raw)
    loss_eq = leq * dist
    loss_neq = jnp.maximum(lneq * (margin - dist), 0.0)
    return (jnp.sum(loss_eq) + jnp.sum(loss_neq)) / n / (n - 1)


if __name__ == "__main__":
    key = jax.random.PRNGKey(0)
    k1, k2, k3, k4, k5, k6 = jax.random.split(key, 6)

    # Small case consistent with the module's forward: (N, D) embeddings + N labels.
    N, D = 8, 32
    embeddings = jax.random.normal(k1, (N, D), dtype=jnp.float32)
    labels = jax.random.randint(k2, (N,), 0, 3).astype(jnp.int32)
    loss = contrastive_loss(embeddings, labels, margin=1.0)
    jax.block_until_ready(loss)
    ref = _reference_loss(embeddings, labels, margin=1.0)
    assert jnp.allclose(loss, ref, rtol=1e-5, atol=1e-5), (loss, ref)

    # Multi-tile case: 300 -> padded to 512, 256-wide tiles, 2x2 grid; exercises
    # validity masks, diagonal vs off-diagonal tiles and per-row-block accumulation.
    N2, D2 = 300, 64
    embeddings2 = jax.random.normal(k3, (N2, D2), dtype=jnp.float32)
    labels2 = jax.random.randint(k4, (N2,), 0, 10).astype(jnp.int32)
    loss2 = contrastive_loss(embeddings2, labels2, margin=1.0)
    jax.block_until_ready(loss2)
    ref2 = _reference_loss(embeddings2, labels2, margin=1.0)
    assert jnp.allclose(loss2, ref2, rtol=1e-4, atol=1e-4), (loss2, ref2)

    # Large-tile path: 1000 -> padded to 1024, 512-wide tiles, 2x2 grid.
    N3, D3 = 1000, 32
    embeddings3 = jax.random.normal(k5, (N3, D3), dtype=jnp.float32)
    labels3 = jax.random.randint(k6, (N3,), 0, 7).astype(jnp.int32)
    loss3 = contrastive_loss(embeddings3, labels3, margin=1.0)
    jax.block_until_ready(loss3)
    ref3 = _reference_loss(embeddings3, labels3, margin=1.0)
    assert jnp.allclose(loss3, ref3, rtol=1e-3, atol=1e-3), (loss3, ref3)

    print("KERNEL_OK")
</pallas_src>

<mosaic_0001>
module attributes {stable_mosaic.version = 11 : i64} {
  func.func @_contrastive_loss_kernel(%arg0: i32, %arg1: i32, %arg2: memref<128x32xf32, #tpu.memory_space<vmem>>, %arg3: memref<32x128xf32, #tpu.memory_space<vmem>>, %arg4: memref<128x1xf32, #tpu.memory_space<vmem>>, %arg5: memref<1x128xf32, #tpu.memory_space<vmem>>, %arg6: memref<128x1xi32, #tpu.memory_space<vmem>>, %arg7: memref<1x128xi32, #tpu.memory_space<vmem>>, %arg8: memref<128x1xf32, #tpu.memory_space<vmem>>, %arg9: memref<1x128xf32, #tpu.memory_space<vmem>>, %arg10: memref<1x1xf32, #tpu.memory_space<smem>>, %arg11: memref<8x128xf32, #tpu.memory_space<vmem>>) attributes {dimension_semantics = [#tpu.dimension_semantics<parallel>, #tpu.dimension_semantics<arbitrary>], iteration_bounds = array<i64: 1, 1>, scalar_prefetch = 0 : i64, scratch_operands = 1 : i64, tpu.core_type = #tpu.core_type<tc>, window_params = [{transform_indices = @transform_0, window_bounds = array<i64: 128, 32>}, {transform_indices = @transform_1, window_bounds = array<i64: 32, 128>}, {transform_indices = @transform_2, window_bounds = array<i64: 128, 1>}, {transform_indices = @transform_3, window_bounds = array<i64: 1, 128>}, {transform_indices = @transform_4, window_bounds = array<i64: 128, 1>}, {transform_indices = @transform_5, window_bounds = array<i64: 1, 128>}, {transform_indices = @transform_6, window_bounds = array<i64: 128, 1>}, {transform_indices = @transform_7, window_bounds = array<i64: 1, 128>}, {transform_indices = @transform_8, window_bounds = array<i64: 1, 1>}]} {
    %c0_i32 = arith.constant 0 : i32
    %0 = arith.cmpi eq, %arg1, %c0_i32 : i32
    %1 = arith.extui %0 : i1 to i32
    %c0_i32_0 = arith.constant 0 : i32
    %2 = arith.cmpi ne, %1, %c0_i32_0 : i32
    scf.if %2 {
      %cst_23 = arith.constant 0.000000e+00 : f32
      %39 = vector.broadcast %cst_23 : f32 to vector<8x128xf32>
      %c0_24 = arith.constant 0 : index
      %c0_25 = arith.constant 0 : index
      %40 = vector.load %arg11[%c0_24, %c0_25] : memref<8x128xf32, #tpu.memory_space<vmem>>, vector<8x128xf32>
      tpu.vector_store %arg11[%c0_24, %c0_25], %39 {strides = array<i32>} : memref<8x128xf32, #tpu.memory_space<vmem>>, vector<8x128xf32>,
    } else {
    }
    %c0 = arith.constant 0 : index
    %c0_1 = arith.constant 0 : index
    %3 = vector.load %arg2[%c0, %c0_1] : memref<128x32xf32, #tpu.memory_space<vmem>>, vector<128x32xf32>
    %c0_2 = arith.constant 0 : index
    %c0_3 = arith.constant 0 : index
    %4 = vector.load %arg3[%c0_2, %c0_3] : memref<32x128xf32, #tpu.memory_space<vmem>>, vector<32x128xf32>
    %cst = arith.constant dense<0.000000e+00> : vector<128x128xf32>
    %5 = tpu.matmul %3, %4, %cst {dimension_numbers = #tpu.dot_dimension_numbers<[1], [0], [0], [1], [0, 0, 1, 1], [], []>} : vector<128x32xf32>, vector<32x128xf32>, vector<128x128xf32> -> vector<128x128xf32>
    %c0_4 = arith.constant 0 : index
    %c0_5 = arith.constant 0 : index
    %6 = vector.load %arg4[%c0_4, %c0_5] : memref<128x1xf32, #tpu.memory_space<vmem>>, vector<128x1xf32>
    %7 = vector.broadcast %6 : vector<128x1xf32> to vector<128x128xf32>
    %8 = arith.addf %7, %5 : vector<128x128xf32>
    %c0_6 = arith.constant 0 : index
    %c0_7 = arith.constant 0 : index
    %9 = vector.load %arg5[%c0_6, %c0_7] : memref<1x128xf32, #tpu.memory_space<vmem>>, vector<1x128xf32>
    %10 = vector.broadcast %9 : vector<1x128xf32> to vector<128x128xf32>
    %11 = arith.addf %8, %10 : vector<128x128xf32>
    %cst_8 = arith.constant 0.000000e+00 : f32
    %12 = vector.broadcast %cst_8 : f32 to vector<128x128xf32>
    %13 = arith.maximumf %11, %12 : vector<128x128xf32>
    %c0_9 = arith.constant 0 : index
    %c0_10 = arith.constant 0 : index
    %14 = vector.load %arg6[%c0_9, %c0_10] : memref<128x1xi32, #tpu.memory_space<vmem>>, vector<128x1xi32>
    %c0_11 = arith.constant 0 : index
    %c0_12 = arith.constant 0 : index
    %15 = vector.load %arg7[%c0_11, %c0_12] : memref<1x128xi32, #tpu.memory_space<vmem>>, vector<1x128xi32>
    %16 = vector.broadcast %14 : vector<128x1xi32> to vector<128x128xi32>
    %17 = vector.broadcast %15 : vector<1x128xi32> to vector<128x128xi32>
    %18 = arith.cmpi eq, %16, %17 : vector<128x128xi32>
    %cst_13 = arith.constant 1.000000e+00 : f32
    %19 = vector.broadcast %cst_13 : f32 to vector<128x128xf32>
    %20 = arith.subf %19, %13 : vector<128x128xf32>
    %cst_14 = arith.constant 0.000000e+00 : f32
    %21 = vector.broadcast %cst_14 : f32 to vector<128x128xf32>
    %22 = arith.maximumf %20, %21 : vector<128x128xf32>
    %23 = arith.select %18, %13, %22 : vector<128x128xi1>, vector<128x128xf32>
    %c0_15 = arith.constant 0 : index
    %c0_16 = arith.constant 0 : index
    %24 = vector.load %arg8[%c0_15, %c0_16] : memref<128x1xf32, #tpu.memory_space<vmem>>, vector<128x1xf32>
    %c0_17 = arith.constant 0 : index
    %c0_18 = arith.constant 0 : index
    %25 = vector.load %arg9[%c0_17, %c0_18] : memref<1x128xf32, #tpu.memory_space<vmem>>, vector<1x128xf32>
    %26 = vector.broadcast %24 : vector<128x1xf32> to vector<128x128xf32>
    %27 = vector.broadcast %25 : vector<1x128xf32> to vector<128x128xf32>
    %28 = arith.mulf %26, %27 : vector<128x128xf32>
    %29 = arith.mulf %23, %28 : vector<128x128xf32>
    %30 = arith.cmpi ne, %arg0, %arg1 : i32
    %31 = arith.extui %30 : i1 to i32
    %c0_i32_19 = arith.constant 0 : i32
    %32 = arith.cmpi ne, %31, %c0_i32_19 : i32
    scf.if %32 {
      %c0_23 = arith.constant 0 : index
      %c0_24 = arith.constant 0 : index
      %39 = vector.load %arg11[%c0_23, %c0_24] : memref<8x128xf32, #tpu.memory_space<vmem>>, vector<8x128xf32>
      %40 = vector.shape_cast %29 : vector<128x128xf32> to vector<16x8x128xf32>
      %cst_25 = arith.constant dense<0.000000e+00> : vector<8x128xf32>
      %41 = vector.multi_reduction <add>, %40, %cst_25 [0] : vector<16x8x128xf32> to vector<8x128xf32>
      %42 = arith.addf %39, %41 : vector<8x128xf32>
      %c0_26 = arith.constant 0 : index
      %c0_27 = arith.constant 0 : index
      %43 = vector.load %arg11[%c0_26, %c0_27] : memref<8x128xf32, #tpu.memory_space<vmem>>, vector<8x128xf32>
      tpu.vector_store %arg11[%c0_26, %c0_27], %42 {strides = array<i32>} : memref<8x128xf32, #tpu.memory_space<vmem>>, vector<8x128xf32>,
    } else {
    }
    %33 = arith.cmpi eq, %arg0, %arg1 : i32
    %34 = arith.extui %33 : i1 to i32
    %c0_i32_20 = arith.constant 0 : i32
    %35 = arith.cmpi ne, %34, %c0_i32_20 : i32
    scf.if %35 {
      %39 = tpu.iota {dimensions = array<i32: 0>} : vector<128x128xi32>
      %40 = tpu.iota {dimensions = array<i32: 1>} : vector<128x128xi32>
      %41 = arith.cmpi ne, %39, %40 : vector<128x128xi32>
      %cst_23 = arith.constant 0.000000e+00 : f32
      %42 = vector.broadcast %cst_23 : f32 to vector<128x128xf32>
      %43 = arith.select %41, %29, %42 : vector<128x128xi1>, vector<128x128xf32>
      %c0_24 = arith.constant 0 : index
      %c0_25 = arith.constant 0 : index
      %44 = vector.load %arg11[%c0_24, %c0_25] : memref<8x128xf32, #tpu.memory_space<vmem>>, vector<8x128xf32>
      %45 = vector.shape_cast %43 : vector<128x128xf32> to vector<16x8x128xf32>
      %cst_26 = arith.constant dense<0.000000e+00> : vector<8x128xf32>
      %46 = vector.multi_reduction <add>, %45, %cst_26 [0] : vector<16x8x128xf32> to vector<8x128xf32>
      %47 = arith.addf %44, %46 : vector<8x128xf32>
      %c0_27 = arith.constant 0 : index
      %c0_28 = arith.constant 0 : index
      %48 = vector.load %arg11[%c0_27, %c0_28] : memref<8x128xf32, #tpu.memory_space<vmem>>, vector<8x128xf32>
      tpu.vector_store %arg11[%c0_27, %c0_28], %47 {strides = array<i32>} : memref<8x128xf32, #tpu.memory_space<vmem>>, vector<8x128xf32>,
    } else {
    }
    %c0_i32_21 = arith.constant 0 : i32
    %36 = arith.cmpi eq, %arg1, %c0_i32_21 : i32
    %37 = arith.extui %36 : i1 to i32
    %c0_i32_22 = arith.constant 0 : i32
    %38 = arith.cmpi ne, %37, %c0_i32_22 : i32
    scf.if %38 {
      %c0_23 = arith.constant 0 : index
      %c0_24 = arith.constant 0 : index
      %39 = vector.load %arg11[%c0_23, %c0_24] : memref<8x128xf32, #tpu.memory_space<vmem>>, vector<8x128xf32>
      %40 = vector.shape_cast %39 : vector<8x128xf32> to vector<1x8x128xf32>
      %cst_25 = arith.constant dense<0.000000e+00> : vector<1xf32>
      %41 = vector.multi_reduction <add>, %40, %cst_25 [1, 2] : vector<1x8x128xf32> to vector<1xf32>
      %42 = vector.shape_cast %41 : vector<1xf32> to vector<1x1x1xf32>
      %43 = vector.extract %42[0, 0, 0] : f32 from vector<1x1x1xf32>
      %c0_26 = arith.constant 0 : index
      %c0_27 = arith.constant 0 : index
      %44 = memref.load %arg10[%c0_26, %c0_27] : memref<1x1xf32, #tpu.memory_space<smem>>
      memref.store %43, %arg10[%c0_26, %c0_27] : memref<1x1xf32, #tpu.memory_space<smem>>
    } else {
    }
    return
  }
  func.func @transform_0(%arg0: i32, %arg1: i32) -> (i32, i32) {
    %c0_i32 = arith.constant 0 : i32
    %c0_i32_0 = arith.constant 0 : i32
    return %arg0, %c0_i32 : i32, i32
  }
  func.func @transform_1(%arg0: i32, %arg1: i32) -> (i32, i32) {
    %c0_i32 = arith.constant 0 : i32
    %c0_i32_0 = arith.constant 0 : i32
    return %c0_i32, %arg1 : i32, i32
  }
  func.func @transform_2(%arg0: i32, %arg1: i32) -> (i32, i32) {
    %c0_i32 = arith.constant 0 : i32
    %c0_i32_0 = arith.constant 0 : i32
    return %arg0, %c0_i32 : i32, i32
  }
  func.func @transform_3(%arg0: i32, %arg1: i32) -> (i32, i32) {
    %c0_i32 = arith.constant 0 : i32
    %c0_i32_0 = arith.constant 0 : i32
    return %c0_i32, %arg1 : i32, i32
  }
  func.func @transform_4(%arg0: i32, %arg1: i32) -> (i32, i32) {
    %c0_i32 = arith.constant 0 : i32
    %c0_i32_0 = arith.constant 0 : i32
    return %arg0, %c0_i32 : i32, i32
  }
  func.func @transform_5(%arg0: i32, %arg1: i32) -> (i32, i32) {
    %c0_i32 = arith.constant 0 : i32
    %c0_i32_0 = arith.constant 0 : i32
    return %c0_i32, %arg1 : i32, i32
  }
  func.func @transform_6(%arg0: i32, %arg1: i32) -> (i32, i32) {
    %c0_i32 = arith.constant 0 : i32
    %c0_i32_0 = arith.constant 0 : i32
    return %arg0, %c0_i32 : i32, i32
  }
  func.func @transform_7(%arg0: i32, %arg1: i32) -> (i32, i32) {
    %c0_i32 = arith.constant 0 : i32
    %c0_i32_0 = arith.constant 0 : i32
    return %c0_i32, %arg1 : i32, i32
  }
  func.func @transform_8(%arg0: i32, %arg1: i32) -> (i32, i32) {
    %c0_i32 = arith.constant 0 : i32
    %c0_i32_0 = arith.constant 0 : i32
    return %arg0, %c0_i32 : i32, i32
  }
}

</mosaic_0001>

<llo_original>
// kernel: tpu_custom_call.1
$region0: #{tpu_custom_call.1}
  #allocation0 [shape = 'u32[]', space=smem, size = 0x4, offset = 0x4, fixed_abs, tag = 'smem constant byte address 0x4 - core index']
  #allocation1 [shape = 'u32[144,128]{1,0:T(1,128)}', space=vmem, size = 0x12000, scoped, tag = 'internal scratch']
  #allocation2 [shape = 'f32[8,128]{1,0:T(8,128)}', space=vmem, size = 0x1000, scoped, tag = 'scratch operand']
  %s0 = inlined_call_operand.vmem [shape: f32[128,32], index: 0, kind: input, shape index: {}]
  %s1 = inlined_call_operand.vmem [shape: f32[32,128], index: 1, kind: input, shape index: {}]
  %s2 = inlined_call_operand.vmem [shape: f32[128,1], index: 2, kind: input, shape index: {}]
  %s3 = inlined_call_operand.vmem [shape: f32[1,128], index: 3, kind: input, shape index: {}]
  %s4 = inlined_call_operand.vmem [shape: s32[128,1], index: 4, kind: input, shape index: {}]
  %s5 = inlined_call_operand.vmem [shape: s32[1,128], index: 5, kind: input, shape index: {}]
  %s6 = inlined_call_operand.vmem [shape: f32[128,1], index: 6, kind: input, shape index: {}]
  %s7 = inlined_call_operand.vmem [shape: f32[1,128], index: 7, kind: input, shape index: {}]
  %s8 = inlined_call_operand.hbm [shape: f32[1,1], index: 8, kind: output, shape index: {}]
  %s9 = sld [smem:[#allocation0]]
  $region58: #{tpu_custom_call.1} parent=0
    _
  %s11 = ssub.s32 1, %s9
  %s12 = scalar_select 0, %s11, %s9
  $region1: #{tpu_custom_call.1} parent=0
    #allocation3 [shape = 'u8[512]{0}', space=smem, size = 0x200, scoped, tag = 'output window, operand 0, single buffered']
    #allocation4 [shape = 's32[1]{0}', space=sflag, size = 0x4, scoped, tag = 'scoped memory for tpu_custom_call.1']
    %13 = vsyncpa [#allocation4], 0
    // Predicated region
    $region2: #{tpu_custom_call.1} parent=1 // pred_check
      _
    $region3: #{tpu_custom_call.1} parent=1 // pred_check_branch
      %15 = sbr.rel (0) target = $region5
    $region4: #{tpu_custom_call.1} parent=1 // pred_region
      _
    $region5: #{tpu_custom_call.1} parent=1 // pred_fallthru
      _
    // Predicated region
    $region6: #{tpu_custom_call.1} parent=1 // pred_check
      _
    $region7: #{tpu_custom_call.1} parent=1 // pred_check_branch
      %17 = sbr.rel (0) target = $region9
    $region8: #{tpu_custom_call.1} parent=1 // pred_region
      _
    $region9: #{tpu_custom_call.1} parent=1 // pred_fallthru
      _
    // Predicated region
    $region10: #{tpu_custom_call.1} parent=1 // pred_check
      _
    $region11: #{tpu_custom_call.1} parent=1 // pred_check_branch
      %19 = sbr.rel (0) target = $region13
    $region12: #{tpu_custom_call.1} parent=1 // pred_region
      _
    $region13: #{tpu_custom_call.1} parent=1 // pred_fallthru
      _
    // Predicated region
    $region14: #{tpu_custom_call.1} parent=1 // pred_check
      _
    $region15: #{tpu_custom_call.1} parent=1 // pred_check_branch
      %21 = sbr.rel (0) target = $region17
    $region16: #{tpu_custom_call.1} parent=1 // pred_region
      _
    $region17: #{tpu_custom_call.1} parent=1 // pred_fallthru
      _
    // Predicated region
    $region18: #{tpu_custom_call.1} parent=1 // pred_check
      _
    $region19: #{tpu_custom_call.1} parent=1 // pred_check_branch
      %23 = sbr.rel (0) target = $region21
    $region20: #{tpu_custom_call.1} parent=1 // pred_region
      _
    $region21: #{tpu_custom_call.1} parent=1 // pred_fallthru
      _
    // Predicated region
    $region22: #{tpu_custom_call.1} parent=1 // pred_check
      _
    $region23: #{tpu_custom_call.1} parent=1 // pred_check_branch
      %25 = sbr.rel (0) target = $region25
    $region24: #{tpu_custom_call.1} parent=1 // pred_region
      _
    $region25: #{tpu_custom_call.1} parent=1 // pred_fallthru
      _
    // Predicated region
    $region26: #{tpu_custom_call.1} parent=1 // pred_check
      _
    $region27: #{tpu_custom_call.1} parent=1 // pred_check_branch
      %27 = sbr.rel (0) target = $region29
    $region28: #{tpu_custom_call.1} parent=1 // pred_region
      _
    $region29: #{tpu_custom_call.1} parent=1 // pred_fallthru
      _
    // Predicated region
    $region30: #{tpu_custom_call.1} parent=1 // pred_check
      _
    $region31: #{tpu_custom_call.1} parent=1 // pred_check_branch
      %29 = sbr.rel (0) target = $region33
    $region32: #{tpu_custom_call.1} parent=1 // pred_region
      _
    $region33: #{tpu_custom_call.1} parent=1 // pred_fallthru
      _
    %p30 = scmp.eq.s32.totalorder 0, 0
    // Predicated region
    $region34: #{tpu_custom_call.1} parent=1 // pred_check
      %p31 = pneg %p30
    $region35: #{tpu_custom_call.1} parent=1 // pred_check_branch
      %33 = sbr.rel (%p31) target = $region37
    $region36: #{tpu_custom_call.1} parent=1 // pred_region
      %34 = vst [vmem:[#allocation2] sm:$0xff] 0.0
    $region37: #{tpu_custom_call.1} parent=1 // pred_fallthru
      _
    %v35 = vld [vmem:[%s0] sm:$0xff]
    %v36 = vld [vmem:[%s0 + $0x8] sm:$0xff]
    %v37 = vld [vmem:[%s0 + $0x10] sm:$0xff]
    %v38 = vld [vmem:[%s0 + $0x18] sm:$0xff]
    %v39 = vld [vmem:[%s0 + $0x20] sm:$0xff]
    %v40 = vld [vmem:[%s0 + $0x28] sm:$0xff]
    %v41 = vld [vmem:[%s0 + $0x30] sm:$0xff]
    %v42 = vld [vmem:[%s0 + $0x38] sm:$0xff]
    %v43 = vld [vmem:[%s0 + $0x40] sm:$0xff]
    %v44 = vld [vmem:[%s0 + $0x48] sm:$0xff]
    %v45 = vld [vmem:[%s0 + $0x50] sm:$0xff]
    %v46 = vld [vmem:[%s0 + $0x58] sm:$0xff]
    %v47 = vld [vmem:[%s0 + $0x60] sm:$0xff]
    %v48 = vld [vmem:[%s0 + $0x68] sm:$0xff]
    %v49 = vld [vmem:[%s0 + $0x70] sm:$0xff]
    %v50 = vld [vmem:[%s0 + $0x78] sm:$0xff]
    %v51 = vld [vmem:[%s1] sm:$0xff]
    %v52 = vld [vmem:[%s1 + $0x8] sm:$0xff]
    %v53 = vld [vmem:[%s1 + $0x10] sm:$0xff]
    %v54 = vld [vmem:[%s1 + $0x18] sm:$0xff]
    %vm55 = vcmask 261120
    %v57 = vsel %vm55, %v35, 0
    %v60 = vsel %vm55, %v36, 0
    %v63 = vsel %vm55, %v37, 0
    %v66 = vsel %vm55, %v38, 0
    %v69 = vsel %vm55, %v39, 0
    %v72 = vsel %vm55, %v40, 0
    %v75 = vsel %vm55, %v41, 0
    %v78 = vsel %vm55, %v42, 0
    %v81 = vsel %vm55, %v43, 0
    %v84 = vsel %vm55, %v44, 0
    %v87 = vsel %vm55, %v45, 0
    %v90 = vsel %vm55, %v46, 0
    %v93 = vsel %vm55, %v47, 0
    %v96 = vsel %vm55, %v48, 0
    %v99 = vsel %vm55, %v49, 0
    %v102 = vsel %vm55, %v50, 0
    %104 = vmatprep.subr.mxu0 0.0
    %105 = vmatpush1.msra.mxu0 0.0
    %106 = vmatprep.subr.mxu0 0.0
    %107 = vmatpush1.msra.mxu0 0.0
    %108 = vmatprep.subr.mxu0 0.0
    %109 = vmatpush1.msra.mxu0 0.0
    %110 = vmatprep.subr.mxu0 0.0
    %111 = vmatpush1.msra.mxu0 0.0
    %112 = vmatprep.subr.mxu0 0.0
    %113 = vmatpush1.msra.mxu0 0.0
    %114 = vmatprep.subr.mxu0 0.0
    %115 = vmatpush1.msra.mxu0 0.0
    %116 = vmatprep.subr.mxu0 0.0
    %117 = vmatpush1.msra.mxu0 0.0
    %118 = vmatprep.subr.mxu0 0.0
    %119 = vmatpush1.msra.mxu0 0.0
    %120 = vmatprep.subr.mxu0 0.0
    %121 = vmatpush1.msra.mxu0 0.0
    %122 = vmatprep.subr.mxu0 0.0
    %123 = vmatpush1.msra.mxu0 0.0
    %124 = vmatprep.subr.mxu0 0.0
    %125 = vmatpush1.msra.mxu0 0.0
    %126 = vmatprep.subr.mxu0 0.0
    %127 = vmatpush1.msra.mxu0 0.0
    %128 = vmatprep.subr.mxu0 0.0
    %129 = vmatpush1.msra.mxu0 %v54
    %130 = vmatprep.subr.mxu0 0.0
    %131 = vmatpush1.msra.mxu0 %v53
    %132 = vmatprep.subr.mxu0 0.0
    %133 = vmatpush1.msra.mxu0 %v52
    %134 = vmatprep.subr.mxu0 0.0
    %135 = vmatpush1.msra.mxu0 %v51
    %136 = vmatprep.subr.mxu0 0.0
    %137 = vmatpush2.msra.mxu0 0.0
    %138 = vmatprep.subr.mxu0 0.0
    %139 = vmatpush2.msra.mxu0 0.0
    %140 = vmatprep.subr.mxu0 0.0
    %141 = vmatpush2.msra.mxu0 0.0
    %142 = vmatprep.subr.mxu0 0.0
    %143 = vmatpush2.msra.mxu0 0.0
    %144 = vmatprep.subr.mxu0 0.0
    %145 = vmatpush2.msra.mxu0 0.0
    %146 = vmatprep.subr.mxu0 0.0
    %147 = vmatpush2.msra.mxu0 0.0
    %148 = vmatprep.subr.mxu0 0.0
    %149 = vmatpush2.msra.mxu0 0.0
    %150 = vmatprep.subr.mxu0 0.0
    %151 = vmatpush2.msra.mxu0 0.0
    %152 = vmatprep.subr.mxu0 0.0
    %153 = vmatpush2.msra.mxu0 0.0
    %154 = vmatprep.subr.mxu0 0.0
    %155 = vmatpush2.msra.mxu0 0.0
    %156 = vmatprep.subr.mxu0 0.0
    %157 = vmatpush2.msra.mxu0 0.0
    %158 = vmatprep.subr.mxu0 0.0
    %159 = vmatpush2.msra.mxu0 0.0
    %160 = vmatprep.subr.mxu0 0.0
    %161 = vmatpush2.msra.mxu0 0.0
    %162 = vmatprep.subr.mxu0 0.0
    %163 = vmatpush2.msra.mxu0 0.0
    %164 = vmatprep.subr.mxu0 0.0
    %165 = vmatpush2.msra.mxu0 0.0
    %166 = vmatprep.subr.mxu0 0.0
    %167 = vmatpush2.msra.mxu0 0.0
    %168 = vmatprep.mubr.f32.mxu0 0.0
    %169 = vmatmul.mubr.f32.gmra.mxu0 %v57
    %v170 = vpop.f32.mrf.mxu0
    %v171 = vadd.f32 0.0, %v170
    %v172 = vpop.f32.mrf.mxu0
    %173 = vmatprep.mubr.f32.mxu0 0.0
    %174 = vmatmul.mubr.f32.gmra.mxu0 %v60
    %v175 = vpop.f32.mrf.mxu0
    %v176 = vadd.f32 0.0, %v175
    %v177 = vpop.f32.mrf.mxu0
    %178 = vmatprep.mubr.f32.mxu0 0.0
    %179 = vmatmul.mubr.f32.gmra.mxu0 %v63
    %v180 = vpop.f32.mrf.mxu0
    %v181 = vadd.f32 0.0, %v180
    %v182 = vpop.f32.mrf.mxu0
    %183 = vmatprep.mubr.f32.mxu0 0.0
    %184 = vmatmul.mubr.f32.gmra.mxu0 %v66
    %v185 = vpop.f32.mrf.mxu0
    %v186 = vadd.f32 0.0, %v185
    %v187 = vpop.f32.mrf.mxu0
    %188 = vmatprep.mubr.f32.mxu0 0.0
    %189 = vmatmul.mubr.f32.gmra.mxu0 %v69
    %v190 = vpop.f32.mrf.mxu0
    %v191 = vadd.f32 0.0, %v190
    %v192 = vpop.f32.mrf.mxu0
    %193 = vmatprep.mubr.f32.mxu0 0.0
    %194 = vmatmul.mubr.f32.gmra.mxu0 %v72
    %v195 = vpop.f32.mrf.mxu0
    %v196 = vadd.f32 0.0, %v195
    %v197 = vpop.f32.mrf.mxu0
    %198 = vmatprep.mubr.f32.mxu0 0.0
    %199 = vmatmul.mubr.f32.gmra.mxu0 %v75
    %v200 = vpop.f32.mrf.mxu0
    %v201 = vadd.f32 0.0, %v200
    %v202 = vpop.f32.mrf.mxu0
    %203 = vmatprep.mubr.f32.mxu0 0.0
    %204 = vmatmul.mubr.f32.gmra.mxu0 %v78
    %v205 = vpop.f32.mrf.mxu0
    %v206 = vadd.f32 0.0, %v205
    %v207 = vpop.f32.mrf.mxu0
    %208 = vmatprep.mubr.f32.mxu0 0.0
    %209 = vmatmul.mubr.f32.gmra.mxu0 %v81
    %v210 = vpop.f32.mrf.mxu0
    %v211 = vadd.f32 0.0, %v210
    %v212 = vpop.f32.mrf.mxu0
    %213 = vmatprep.mubr.f32.mxu0 0.0
    %214 = vmatmul.mubr.f32.gmra.mxu0 %v84
    %v215 = vpop.f32.mrf.mxu0
    %v216 = vadd.f32 0.0, %v215
    %v217 = vpop.f32.mrf.mxu0
    %218 = vmatprep.mubr.f32.mxu0 0.0
    %219 = vmatmul.mubr.f32.gmra.mxu0 %v87
    %v220 = vpop.f32.mrf.mxu0
    %v221 = vadd.f32 0.0, %v220
    %v222 = vpop.f32.mrf.mxu0
    %223 = vmatprep.mubr.f32.mxu0 0.0
    %224 = vmatmul.mubr.f32.gmra.mxu0 %v90
    %v225 = vpop.f32.mrf.mxu0
    %v226 = vadd.f32 0.0, %v225
    %v227 = vpop.f32.mrf.mxu0
    %228 = vmatprep.mubr.f32.mxu0 0.0
    %229 = vmatmul.mubr.f32.gmra.mxu0 %v93
    %v230 = vpop.f32.mrf.mxu0
    %v231 = vadd.f32 0.0, %v230
    %v232 = vpop.f32.mrf.mxu0
    %233 = vmatprep.mubr.f32.mxu0 0.0
    %234 = vmatmul.mubr.f32.gmra.mxu0 %v96
    %v235 = vpop.f32.mrf.mxu0
    %v236 = vadd.f32 0.0, %v235
    %v237 = vpop.f32.mrf.mxu0
    %238 = vmatprep.mubr.f32.mxu0 0.0
    %239 = vmatmul.mubr.f32.gmra.mxu0 %v99
    %v240 = vpop.f32.mrf.mxu0
    %v241 = vadd.f32 0.0, %v240
    %v242 = vpop.f32.mrf.mxu0
    %243 = vmatprep.mubr.f32.mxu0 0.0
    %244 = vmatmul.mubr.f32.gmra.mxu0 %v102
    %v245 = vpop.f32.mrf.mxu0
    %v246 = vadd.f32 0.0, %v245
    %v247 = vpop.f32.mrf.mxu0
    %248 = vdwg.mxu0
    %v249 = vld [vmem:[%s2] sm:$0xff]
    %v250 = vld [vmem:[%s2 + $0x8] sm:$0xff]
    %v251 = vld [vmem:[%s2 + $0x10] sm:$0xff]
    %v252 = vld [vmem:[%s2 + $0x18] sm:$0xff]
    %v253 = vld [vmem:[%s2 + $0x20] sm:$0xff]
    %v254 = vld [vmem:[%s2 + $0x28] sm:$0xff]
    %v255 = vld [vmem:[%s2 + $0x30] sm:$0xff]
    %v256 = vld [vmem:[%s2 + $0x38] sm:$0xff]
    %v257 = vld [vmem:[%s2 + $0x40] sm:$0xff]
    %v258 = vld [vmem:[%s2 + $0x48] sm:$0xff]
    %v259 = vld [vmem:[%s2 + $0x50] sm:$0xff]
    %v260 = vld [vmem:[%s2 + $0x58] sm:$0xff]
    %v261 = vld [vmem:[%s2 + $0x60] sm:$0xff]
    %v262 = vld [vmem:[%s2 + $0x68] sm:$0xff]
    %v263 = vld [vmem:[%s2 + $0x70] sm:$0xff]
    %v264 = vld [vmem:[%s2 + $0x78] sm:$0xff]
    %266 = vset.pattern.permute.xlu0 0
    %267 = vperm.xlu0 %266, %v249
    %v268 = vpop.permute.xlu0 %267
    %271 = vset.pattern.permute.xlu0 0
    %272 = vperm.xlu0 %271, %v250
    %v273 = vpop.permute.xlu0 %272
    %276 = vset.pattern.permute.xlu0 0
    %277 = vperm.xlu0 %276, %v251
    %v278 = vpop.permute.xlu0 %277
    %281 = vset.pattern.permute.xlu0 0
    %282 = vperm.xlu0 %281, %v252
    %v283 = vpop.permute.xlu0 %282
    %286 = vset.pattern.permute.xlu0 0
    %287 = vperm.xlu0 %286, %v253
    %v288 = vpop.permute.xlu0 %287
    %291 = vset.pattern.permute.xlu0 0
    %292 = vperm.xlu0 %291, %v254
    %v293 = vpop.permute.xlu0 %292
    %296 = vset.pattern.permute.xlu0 0
    %297 = vperm.xlu0 %296, %v255
    %v298 = vpop.permute.xlu0 %297
    %301 = vset.pattern.permute.xlu0 0
    %302 = vperm.xlu0 %301, %v256
    %v303 = vpop.permute.xlu0 %302
    %306 = vset.pattern.permute.xlu0 0
    %307 = vperm.xlu0 %306, %v257
    %v308 = vpop.permute.xlu0 %307
    %311 = vset.pattern.permute.xlu0 0
    %312 = vperm.xlu0 %311, %v258
    %v313 = vpop.permute.xlu0 %312
    %316 = vset.pattern.permute.xlu0 0
    %317 = vperm.xlu0 %316, %v259
    %v318 = vpop.permute.xlu0 %317
    %321 = vset.pattern.permute.xlu0 0
    %322 = vperm.xlu0 %321, %v260
    %v323 = vpop.permute.xlu0 %322
    %326 = vset.pattern.permute.xlu0 0
    %327 = vperm.xlu0 %326, %v261
    %v328 = vpop.permute.xlu0 %327
    %331 = vset.pattern.permute.xlu0 0
    %332 = vperm.xlu0 %331, %v262
    %v333 = vpop.permute.xlu0 %332
    %336 = vset.pattern.permute.xlu0 0
    %337 = vperm.xlu0 %336, %v263
    %v338 = vpop.permute.xlu0 %337
    %341 = vset.pattern.permute.xlu0 0
    %342 = vperm.xlu0 %341, %v264
    %v343 = vpop.permute.xlu0 %342
    %v345 = vadd.f32 %v268, %v171
    %v346 = vadd.f32 %v273, %v176
    %v347 = vadd.f32 %v278, %v181
    %v348 = vadd.f32 %v283, %v186
    %v349 = vadd.f32 %v288, %v191
    %v350 = vadd.f32 %v293, %v196
    %v351 = vadd.f32 %v298, %v201
    %v352 = vadd.f32 %v303, %v206
    %v353 = vadd.f32 %v308, %v211
    %v354 = vadd.f32 %v313, %v216
    %v355 = vadd.f32 %v318, %v221
    %v356 = vadd.f32 %v323, %v226
    %v357 = vadd.f32 %v328, %v231
    %v358 = vadd.f32 %v333, %v236
    %v359 = vadd.f32 %v338, %v241
    %v360 = vadd.f32 %v343, %v246
    %v361 = vld [vmem:[%s3] sm:$0x1]
    %v363 = vlaneseq
    %v364 = vshrl.u32 %v363, 7
    %v365 = vsub.s32 0, %v364
    %v366 = vrot.slane %v361, %v365
    %v368 = vadd.f32 %v345, %v366
    %v369 = vadd.f32 %v346, %v366
    %v370 = vadd.f32 %v347, %v366
    %v371 = vadd.f32 %v348, %v366
    %v372 = vadd.f32 %v349, %v366
    %v373 = vadd.f32 %v350, %v366
    %v374 = vadd.f32 %v351, %v366
    %v375 = vadd.f32 %v352, %v366
    %v376 = vadd.f32 %v353, %v366
    %v377 = vadd.f32 %v354, %v366
    %v378 = vadd.f32 %v355, %v366
    %v379 = vadd.f32 %v356, %v366
    %v380 = vadd.f32 %v357, %v366
    %v381 = vadd.f32 %v358, %v366
    %v382 = vadd.f32 %v359, %v366
    %v383 = vadd.f32 %v360, %v366
    %v384 = vmax.f32 %v368, 0.0
    %v385 = vmax.f32 %v369, 0.0
    %v386 = vmax.f32 %v370, 0.0
    %v387 = vmax.f32 %v371, 0.0
    %v388 = vmax.f32 %v372, 0.0
    %v389 = vmax.f32 %v373, 0.0
    %v390 = vmax.f32 %v374, 0.0
    %v391 = vmax.f32 %v375, 0.0
    %v392 = vmax.f32 %v376, 0.0
    %v393 = vmax.f32 %v377, 0.0
    %v394 = vmax.f32 %v378, 0.0
    %v395 = vmax.f32 %v379, 0.0
    %v396 = vmax.f32 %v380, 0.0
    %v397 = vmax.f32 %v381, 0.0
    %v398 = vmax.f32 %v382, 0.0
    %v399 = vmax.f32 %v383, 0.0
    %v400 = vld [vmem:[%s4] sm:$0xff]
    %v401 = vld [vmem:[%s4 + $0x8] sm:$0xff]
    %v402 = vld [vmem:[%s4 + $0x10] sm:$0xff]
    %v403 = vld [vmem:[%s4 + $0x18] sm:$0xff]
    %v404 = vld [vmem:[%s4 + $0x20] sm:$0xff]
    %v405 = vld [vmem:[%s4 + $0x28] sm:$0xff]
    %v406 = vld [vmem:[%s4 + $0x30] sm:$0xff]
    %v407 = vld [vmem:[%s4 + $0x38] sm:$0xff]
    %v408 = vld [vmem:[%s4 + $0x40] sm:$0xff]
    %v409 = vld [vmem:[%s4 + $0x48] sm:$0xff]
    %v410 = vld [vmem:[%s4 + $0x50] sm:$0xff]
    %v411 = vld [vmem:[%s4 + $0x58] sm:$0xff]
    %v412 = vld [vmem:[%s4 + $0x60] sm:$0xff]
    %v413 = vld [vmem:[%s4 + $0x68] sm:$0xff]
    %v414 = vld [vmem:[%s4 + $0x70] sm:$0xff]
    %v415 = vld [vmem:[%s4 + $0x78] sm:$0xff]
    %v416 = vld [vmem:[%s5] sm:$0x1]
    %417 = vset.pattern.permute.xlu0 0
    %418 = vperm.xlu0 %417, %v400
    %v419 = vpop.permute.xlu0 %418
    %420 = vset.pattern.permute.xlu0 0
    %421 = vperm.xlu0 %420, %v401
    %v422 = vpop.permute.xlu0 %421
    %423 = vset.pattern.permute.xlu0 0
    %424 = vperm.xlu0 %423, %v402
    %v425 = vpop.permute.xlu0 %424
    %426 = vset.pattern.permute.xlu0 0
    %427 = vperm.xlu0 %426, %v403
    %v428 = vpop.permute.xlu0 %427
    %429 = vset.pattern.permute.xlu0 0
    %430 = vperm.xlu0 %429, %v404
    %v431 = vpop.permute.xlu0 %430
    %432 = vset.pattern.permute.xlu0 0
    %433 = vperm.xlu0 %432, %v405
    %v434 = vpop.permute.xlu0 %433
    %435 = vset.pattern.permute.xlu0 0
    %436 = vperm.xlu0 %435, %v406
    %v437 = vpop.permute.xlu0 %436
    %438 = vset.pattern.permute.xlu0 0
    %439 = vperm.xlu0 %438, %v407
    %v440 = vpop.permute.xlu0 %439
    %441 = vset.pattern.permute.xlu0 0
    %442 = vperm.xlu0 %441, %v408
    %v443 = vpop.permute.xlu0 %442
    %444 = vset.pattern.permute.xlu0 0
    %445 = vperm.xlu0 %444, %v409
    %v446 = vpop.permute.xlu0 %445
    %447 = vset.pattern.permute.xlu0 0
    %448 = vperm.xlu0 %447, %v410
    %v449 = vpop.permute.xlu0 %448
    %450 = vset.pattern.permute.xlu0 0
    %451 = vperm.xlu0 %450, %v411
    %v452 = vpop.permute.xlu0 %451
    %453 = vset.pattern.permute.xlu0 0
    %454 = vperm.xlu0 %453, %v412
    %v455 = vpop.permute.xlu0 %454
    %456 = vset.pattern.permute.xlu0 0
    %457 = vperm.xlu0 %456, %v413
    %v458 = vpop.permute.xlu0 %457
    %459 = vset.pattern.permute.xlu0 0
    %460 = vperm.xlu0 %459, %v414
    %v461 = vpop.permute.xlu0 %460
    %462 = vset.pattern.permute.xlu0 0
    %463 = vperm.xlu0 %462, %v415
    %v464 = vpop.permute.xlu0 %463
    %v465 = vlaneseq
    %v466 = vshrl.u32 %v465, 7
    %v467 = vsub.s32 0, %v466
    %v468 = vrot.slane %v416, %v467
    %vm469 = vcmp.eq.s32.totalorder %v419, %v468
    %vm470 = vcmp.eq.s32.totalorder %v422, %v468
    %vm471 = vcmp.eq.s32.totalorder %v425, %v468
    %vm472 = vcmp.eq.s32.totalorder %v428, %v468
    %vm473 = vcmp.eq.s32.totalorder %v431, %v468
    %vm474 = vcmp.eq.s32.totalorder %v434, %v468
    %vm475 = vcmp.eq.s32.totalorder %v437, %v468
    %vm476 = vcmp.eq.s32.totalorder %v440, %v468
    %vm477 = vcmp.eq.s32.totalorder %v443, %v468
    %vm478 = vcmp.eq.s32.totalorder %v446, %v468
    %vm479 = vcmp.eq.s32.totalorder %v449, %v468
    %vm480 = vcmp.eq.s32.totalorder %v452, %v468
    %vm481 = vcmp.eq.s32.totalorder %v455, %v468
    %vm482 = vcmp.eq.s32.totalorder %v458, %v468
    %vm483 = vcmp.eq.s32.totalorder %v461, %v468
    %vm484 = vcmp.eq.s32.totalorder %v464, %v468
    %v485 = vsub.f32 1.0, %v384
    %v486 = vsub.f32 1.0, %v385
    %v487 = vsub.f32 1.0, %v386
    %v488 = vsub.f32 1.0, %v387
    %v489 = vsub.f32 1.0, %v388
    %v490 = vsub.f32 1.0, %v389
    %v491 = vsub.f32 1.0, %v390
    %v492 = vsub.f32 1.0, %v391
    %v493 = vsub.f32 1.0, %v392
    %v494 = vsub.f32 1.0, %v393
    %v495 = vsub.f32 1.0, %v394
    %v496 = vsub.f32 1.0, %v395
    %v497 = vsub.f32 1.0, %v396
    %v498 = vsub.f32 1.0, %v397
    %v499 = vsub.f32 1.0, %v398
    %v500 = vsub.f32 1.0, %v399
    %v501 = vmax.f32 %v485, 0.0
    %v502 = vmax.f32 %v486, 0.0
    %v503 = vmax.f32 %v487, 0.0
    %v504 = vmax.f32 %v488, 0.0
    %v505 = vmax.f32 %v489, 0.0
    %v506 = vmax.f32 %v490, 0.0
    %v507 = vmax.f32 %v491, 0.0
    %v508 = vmax.f32 %v492, 0.0
    %v509 = vmax.f32 %v493, 0.0
    %v510 = vmax.f32 %v494, 0.0
    %v511 = vmax.f32 %v495, 0.0
    %v512 = vmax.f32 %v496, 0.0
    %v513 = vmax.f32 %v497, 0.0
    %v514 = vmax.f32 %v498, 0.0
    %v515 = vmax.f32 %v499, 0.0
    %v516 = vmax.f32 %v500, 0.0
    %v517 = vsel %vm469, %v384, %v501
    %v518 = vsel %vm470, %v385, %v502
    %v519 = vsel %vm471, %v386, %v503
    %v520 = vsel %vm472, %v387, %v504
    %v521 = vsel %vm473, %v388, %v505
    %v522 = vsel %vm474, %v389, %v506
    %v523 = vsel %vm475, %v390, %v507
    %v524 = vsel %vm476, %v391, %v508
    %v525 = vsel %vm477, %v392, %v509
    %v526 = vsel %vm478, %v393, %v510
    %v527 = vsel %vm479, %v394, %v511
    %v528 = vsel %vm480, %v395, %v512
    %v529 = vsel %vm481, %v396, %v513
    %v530 = vsel %vm482, %v397, %v514
    %v531 = vsel %vm483, %v398, %v515
    %v532 = vsel %vm484, %v399, %v516
    %v533 = vld [vmem:[%s6] sm:$0xff]
    %v534 = vld [vmem:[%s6 + $0x8] sm:$0xff]
    %v535 = vld [vmem:[%s6 + $0x10] sm:$0xff]
    %v536 = vld [vmem:[%s6 + $0x18] sm:$0xff]
    %v537 = vld [vmem:[%s6 + $0x20] sm:$0xff]
    %v538 = vld [vmem:[%s6 + $0x28] sm:$0xff]
    %v539 = vld [vmem:[%s6 + $0x30] sm:$0xff]
    %v540 = vld [vmem:[%s6 + $0x38] sm:$0xff]
    %v541 = vld [vmem:[%s6 + $0x40] sm:$0xff]
    %v542 = vld [vmem:[%s6 + $0x48] sm:$0xff]
    %v543 = vld [vmem:[%s6 + $0x50] sm:$0xff]
    %v544 = vld [vmem:[%s6 + $0x58] sm:$0xff]
    %v545 = vld [vmem:[%s6 + $0x60] sm:$0xff]
    %v546 = vld [vmem:[%s6 + $0x68] sm:$0xff]
    %v547 = vld [vmem:[%s6 + $0x70] sm:$0xff]
    %v548 = vld [vmem:[%s6 + $0x78] sm:$0xff]
    %v549 = vld [vmem:[%s7] sm:$0x1]
    %551 = vset.pattern.permute.xlu0 0
    %552 = vperm.xlu0 %551, %v533
    %v553 = vpop.permute.xlu0 %552
    %556 = vset.pattern.permute.xlu0 0
    %557 = vperm.xlu0 %556, %v534
    %v558 = vpop.permute.xlu0 %557
    %561 = vset.pattern.permute.xlu0 0
    %562 = vperm.xlu0 %561, %v535
    %v563 = vpop.permute.xlu0 %562
    %566 = vset.pattern.permute.xlu0 0
    %567 = vperm.xlu0 %566, %v536
    %v568 = vpop.permute.xlu0 %567
    %571 = vset.pattern.permute.xlu0 0
    %572 = vperm.xlu0 %571, %v537
    %v573 = vpop.permute.xlu0 %572
    %576 = vset.pattern.permute.xlu0 0
    %577 = vperm.xlu0 %576, %v538
    %v578 = vpop.permute.xlu0 %577
    %581 = vset.pattern.permute.xlu0 0
    %582 = vperm.xlu0 %581, %v539
    %v583 = vpop.permute.xlu0 %582
    %586 = vset.pattern.permute.xlu0 0
    %587 = vperm.xlu0 %586, %v540
    %v588 = vpop.permute.xlu0 %587
    %591 = vset.pattern.permute.xlu0 0
    %592 = vperm.xlu0 %591, %v541
    %v593 = vpop.permute.xlu0 %592
    %596 = vset.pattern.permute.xlu0 0
    %597 = vperm.xlu0 %596, %v542
    %v598 = vpop.permute.xlu0 %597
    %601 = vset.pattern.permute.xlu0 0
    %602 = vperm.xlu0 %601, %v543
    %v603 = vpop.permute.xlu0 %602
    %606 = vset.pattern.permute.xlu0 0
    %607 = vperm.xlu0 %606, %v544
    %v608 = vpop.permute.xlu0 %607
    %611 = vset.pattern.permute.xlu0 0
    %612 = vperm.xlu0 %611, %v545
    %v613 = vpop.permute.xlu0 %612
    %616 = vset.pattern.permute.xlu0 0
    %617 = vperm.xlu0 %616, %v546
    %v618 = vpop.permute.xlu0 %617
    %621 = vset.pattern.permute.xlu0 0
    %622 = vperm.xlu0 %621, %v547
    %v623 = vpop.permute.xlu0 %622
    %626 = vset.pattern.permute.xlu0 0
    %627 = vperm.xlu0 %626, %v548
    %v628 = vpop.permute.xlu0 %627
    %v631 = vlaneseq
    %v632 = vshrl.u32 %v631, 7
    %v633 = vsub.s32 0, %v632
    %v634 = vrot.slane %v549, %v633
    %v636 = vmul.f32 %v553, %v634
    %v637 = vmul.f32 %v558, %v634
    %v638 = vmul.f32 %v563, %v634
    %v639 = vmul.f32 %v568, %v634
    %v640 = vmul.f32 %v573, %v634
    %v641 = vmul.f32 %v578, %v634
    %v642 = vmul.f32 %v583, %v634
    %v643 = vmul.f32 %v588, %v634
    %v644 = vmul.f32 %v593, %v634
    %v645 = vmul.f32 %v598, %v634
    %v646 = vmul.f32 %v603, %v634
    %v647 = vmul.f32 %v608, %v634
    %v648 = vmul.f32 %v613, %v634
    %v649 = vmul.f32 %v618, %v634
    %v650 = vmul.f32 %v623, %v634
    %v651 = vmul.f32 %v628, %v634
    %v652 = vmul.f32 %v517, %v636
    %v653 = vmul.f32 %v518, %v637
    %v654 = vmul.f32 %v519, %v638
    %v655 = vmul.f32 %v520, %v639
    %v656 = vmul.f32 %v521, %v640
    %v657 = vmul.f32 %v522, %v641
    %v658 = vmul.f32 %v523, %v642
    %v659 = vmul.f32 %v524, %v643
    %v660 = vmul.f32 %v525, %v644
    %v661 = vmul.f32 %v526, %v645
    %v662 = vmul.f32 %v527, %v646
    %v663 = vmul.f32 %v528, %v647
    %v664 = vmul.f32 %v529, %v648
    %v665 = vmul.f32 %v530, %v649
    %v666 = vmul.f32 %v531, %v650
    %v667 = vmul.f32 %v532, %v651
    %p668 = scmp.ne.s32.totalorder 0, 0
    // Predicated region
    $region38: #{tpu_custom_call.1} parent=1 // pred_check
      %p669 = pneg %p668
    $region39: #{tpu_custom_call.1} parent=1 // pred_check_branch
      %671 = sbr.rel (%p669) target = $region41
    $region40: #{tpu_custom_call.1} parent=1 // pred_region
      %v672 = vld [vmem:[#allocation2] sm:$0xff]
      %v673 = vadd.f32 %v652, %v653
      %v674 = vadd.f32 %v673, %v654
      %v675 = vadd.f32 %v674, %v655
      %v676 = vadd.f32 %v675, %v656
      %v677 = vadd.f32 %v676, %v657
      %v678 = vadd.f32 %v677, %v658
      %v679 = vadd.f32 %v678, %v659
      %v680 = vadd.f32 %v679, %v660
      %v681 = vadd.f32 %v680, %v661
      %v682 = vadd.f32 %v681, %v662
      %v683 = vadd.f32 %v682, %v663
      %v684 = vadd.f32 %v683, %v664
      %v685 = vadd.f32 %v684, %v665
      %v686 = vadd.f32 %v685, %v666
      %v687 = vadd.f32 %v686, %v667
      %v688 = vadd.f32 %v672, %v687
      %689 = vst [vmem:[#allocation2] sm:$0xff] %v688
    $region41: #{tpu_custom_call.1} parent=1 // pred_fallthru
      _
    %p690 = scmp.eq.s32.totalorder 0, 0
    // Predicated region
    $region42: #{tpu_custom_call.1} parent=1 // pred_check
      %p691 = pneg %p690
    $region43: #{tpu_custom_call.1} parent=1 // pred_check_branch
      %693 = sbr.rel (%p691) target = $region45
    $region44: #{tpu_custom_call.1} parent=1 // pred_region
      %v694 = vlaneseq
      %v695 = vshrl.u32 %v694, 7
      %v696 = vadd.s32 %v695, 8
      %v697 = vadd.s32 %v695, 16
      %v698 = vadd.s32 %v695, 24
      %v699 = vadd.s32 %v695, 32
      %v700 = vadd.s32 %v695, 40
      %v701 = vadd.s32 %v695, 48
      %v702 = vadd.s32 %v695, 56
      %v703 = vadd.s32 %v695, 64
      %v704 = vadd.s32 %v695, 72
      %v705 = vadd.s32 %v695, 80
      %v706 = vadd.s32 %v695, 88
      %v707 = vadd.s32 %v695, 96
      %v708 = vadd.s32 %v695, 104
      %v709 = vadd.s32 %v695, 112
      %v710 = vadd.s32 %v695, 120
      %v711 = vlaneseq
      %v712 = vand.u32 %v711, 127
      %vm713 = vcmp.ne.s32.totalorder %v695, %v712
      %vm714 = vcmp.ne.s32.totalorder %v696, %v712
      %vm715 = vcmp.ne.s32.totalorder %v697, %v712
      %vm716 = vcmp.ne.s32.totalorder %v698, %v712
      %vm717 = vcmp.ne.s32.totalorder %v699, %v712
      %vm718 = vcmp.ne.s32.totalorder %v700, %v712
      %vm719 = vcmp.ne.s32.totalorder %v701, %v712
      %vm720 = vcmp.ne.s32.totalorder %v702, %v712
      %vm721 = vcmp.ne.s32.totalorder %v703, %v712
      %vm722 = vcmp.ne.s32.totalorder %v704, %v712
      %vm723 = vcmp.ne.s32.totalorder %v705, %v712
      %vm724 = vcmp.ne.s32.totalorder %v706, %v712
      %vm725 = vcmp.ne.s32.totalorder %v707, %v712
      %vm726 = vcmp.ne.s32.totalorder %v708, %v712
      %vm727 = vcmp.ne.s32.totalorder %v709, %v712
      %vm728 = vcmp.ne.s32.totalorder %v710, %v712
      %v729 = vsel %vm713, %v652, 0.0
      %v730 = vsel %vm714, %v653, 0.0
      %v731 = vsel %vm715, %v654, 0.0
      %v732 = vsel %vm716, %v655, 0.0
      %v733 = vsel %vm717, %v656, 0.0
      %v734 = vsel %vm718, %v657, 0.0
      %v735 = vsel %vm719, %v658, 0.0
      %v736 = vsel %vm720, %v659, 0.0
      %v737 = vsel %vm721, %v660, 0.0
      %v738 = vsel %vm722, %v661, 0.0
      %v739 = vsel %vm723, %v662, 0.0
      %v740 = vsel %vm724, %v663, 0.0
      %v741 = vsel %vm725, %v664, 0.0
      %v742 = vsel %vm726, %v665, 0.0
      %v743 = vsel %vm727, %v666, 0.0
      %v744 = vsel %vm728, %v667, 0.0
      %v745 = vld [vmem:[#allocation2] sm:$0xff]
      %v746 = vadd.f32 %v729, %v730
      %v747 = vadd.f32 %v746, %v731
      %v748 = vadd.f32 %v747, %v732
      %v749 = vadd.f32 %v748, %v733
      %v750 = vadd.f32 %v749, %v734
      %v751 = vadd.f32 %v750, %v735
      %v752 = vadd.f32 %v751, %v736
      %v753 = vadd.f32 %v752, %v737
      %v754 = vadd.f32 %v753, %v738
      %v755 = vadd.f32 %v754, %v739
      %v756 = vadd.f32 %v755, %v740
      %v757 = vadd.f32 %v756, %v741
      %v758 = vadd.f32 %v757, %v742
      %v759 = vadd.f32 %v758, %v743
      %v760 = vadd.f32 %v759, %v744
      %v761 = vadd.f32 %v745, %v760
      %762 = vst [vmem:[#allocation2] sm:$0xff] %v761
    $region45: #{tpu_custom_call.1} parent=1 // pred_fallthru
      _
    // Predicated region
    $region46: #{tpu_custom_call.1} parent=1 // pred_check
      %p763 = pneg %p30
    $region47: #{tpu_custom_call.1} parent=1 // pred_check_branch
      %765 = sbr.rel (%p763) target = $region49
    $region48: #{tpu_custom_call.1} parent=1 // pred_region
      %v766 = vld [vmem:[#allocation2] sm:$0xff]
      %767 = vadd.xlane.f32.xlu0 %v766
      %v768 = vpop.xlane.xlu0 %767
      %v769 = vrot.slane %v768, 4
      %v770 = vadd.f32 %v768, %v769
      %v771 = vrot.slane %v770, 2
      %v772 = vadd.f32 %v770, %v771
      %v773 = vrot.slane %v772, 1
      %v774 = vadd.f32 %v772, %v773
      %s775 = vtos %v774
      %s776 = scalar_lea.smem [#allocation3], 0
      %777 = sst [smem:[%s776]] %s775
    $region49: #{tpu_custom_call.1} parent=1 // pred_fallthru
      _
    // Predicated region
    $region50: #{tpu_custom_call.1} parent=1 // pred_check
      _
    $region51: #{tpu_custom_call.1} parent=1 // pred_check_branch
      %779 = sbr.rel (0) target = $region53
    $region52: #{tpu_custom_call.1} parent=1 // pred_region
      %s781 = ssub.s32 16, 16
      %782 = vsyncadd [#allocation4], %s781
      %785 = dma.smem_to_hbm [#allocation3], 16, %s8, [#allocation4]
    $region53: #{tpu_custom_call.1} parent=1 // pred_fallthru
      _
    // Predicated region
    $region54: #{tpu_custom_call.1} parent=1 // pred_check
      _
    $region55: #{tpu_custom_call.1} parent=1 // pred_check_branch
      %787 = sbr.rel (0) target = $region57
    $region56: #{tpu_custom_call.1} parent=1 // pred_region
      %788 = dma.done [#allocation4], 16
    $region57: #{tpu_custom_call.1} parent=1 // pred_fallthru
      _
    %789 = sfence
    %790 = vsyncpa [#allocation4], 1

</llo_original>
